<compile_context>
chip_gen: v5e
topology: v5e:2x2
jax: 0.10.0
libtpu: 0.0.40
codegen_flags: <defaults>
</compile_context>

<pallas_src>
import numpy as np
import jax
import jax.numpy as jnp
from jax.experimental import pallas as pl
from jax.experimental.pallas import tpu as pltpu


FILTER = (1.0, 3.0, 3.0, 1.0)
_MAX_TILE = 128  # caps batched-matmul unroll / compile time; per-step DMA stays large


def _normalized_taps(filt):
    f = np.asarray(filt, dtype=np.float64)
    return f / f.sum()


def _pads(k):
    if k % 2 == 1:
        return k // 2, k // 2
    return k // 2, (k - 1) // 2


def _band_matrix(n, taps, pad1):
    """M[o, i] = taps[i - o + pad1] (0 elsewhere).

    out = M @ v applies the 1-D normalized blur with zero padding (pad1 leading,
    K-1-pad1 trailing) baked in via edge truncation."""
    K = len(taps)
    m = np.zeros((n, n), np.float64)
    for o in range(n):
        for i in range(max(0, o - pad1), min(n, o - pad1 + K)):
            m[o, i] = taps[i - o + pad1]
    return m


def _round_up(v, m):
    return (v + m - 1) // m * m


def _blur2d_kernel(a_ref, b_ref, x_ref, o_ref):
    tile, H, W = x_ref.shape
    x = x_ref[...]                                        # (tile, H, W), HBM dtype

    # ---- Horizontal (lane) pass: mix columns with the banded matrix B ----
    sublane = 8 * max(1, 4 // jnp.dtype(x.dtype).itemsize)   # f32: 8, bf16: 16
    if H % sublane == 0:
        # Fuse batch and rows into a single big MXU matmul (best utilization);
        # the (tile, H) -> (tile*H,) merge is layout-free when H is sublane-aligned.
        t = jnp.dot(x.reshape(tile * H, W), b_ref[...],
                    preferred_element_type=jnp.float32)
        t = t.reshape(tile, H, W)
    else:
        bb = jnp.broadcast_to(b_ref[...], (tile, W, W))
        t = jax.lax.dot_general(
            x, bb,
            dimension_numbers=(((2,), (1,)), ((0,), (0,))),
            preferred_element_type=jnp.float32)
    t = t.astype(x.dtype)                                 # bf16 stays bf16 on the MXU

    # ---- Vertical (sublane) pass: mix rows with the banded matrix A, per plane ----
    aa = jnp.broadcast_to(a_ref[...], (tile, H, H))
    out = jax.lax.dot_general(
        aa, t,
        dimension_numbers=(((2,), (1,)), ((0,), (0,))),
        preferred_element_type=jnp.float32)               # (tile, H, W) f32

    o_ref[...] = out.astype(o_ref.dtype)


def blur2d(x, filt=FILTER):
    """x: (B, C, H, W) float array. Same forward semantics as PyTorch Blur2d."""
    B, C, H, W = x.shape
    taps = _normalized_taps(filt)
    pad1, _pad2 = _pads(len(taps))  # trailing padding is implicit in the banded matrices

    # Banded separable operators: out_plane = A @ x_plane @ Bm.
    A_np = _band_matrix(H, taps, pad1)        # applied from the left  (rows / H)
    B_np = _band_matrix(W, taps, pad1).T      # applied from the right (cols / W)
    mat_dtype = x.dtype                       # taps 1/8, 3/8 are exact in bf16/f32
    A = jnp.asarray(A_np, dtype=mat_dtype)
    Bm = jnp.asarray(B_np, dtype=mat_dtype)

    BC = B * C
    x3 = x.reshape(BC, H, W)                  # metadata-only reshape (no HBM traffic)

    # ---------------- VMEM-aware tile (planes per grid step) ----------------
    try:
        vmem_cap = int(pltpu.get_tpu_info().vmem_capacity_bytes)
    except Exception:
        vmem_cap = 64 * 1024 * 1024           # conservative fallback (v7x per-core)

    itemsize = jnp.dtype(x.dtype).itemsize
    # VMEM footprints round up to (sublane, lane) = (16, 128) hardware tiles.
    Hr, Wr = _round_up(H, 16), _round_up(W, 128)
    Ar = _round_up(H, 16) * _round_up(H, 128)
    Br = _round_up(W, 16) * _round_up(W, 128)
    plane_io = Hr * Wr * itemsize
    plane_f32 = Hr * Wr * 4
    per_plane = (2 * plane_io          # input block (double-buffered)
                 + 2 * plane_io        # output block (double-buffered)
                 + 2 * plane_f32       # f32 matmul accumulators (t, out)
                 + plane_io            # intermediate cast back to I/O dtype
                 + Ar * itemsize)      # per-plane broadcast of A in the batched dot
    const_bytes = 2 * (Ar + Br) * itemsize    # A / B blocks (double-buffered, loaded once)

    budget = (3 * vmem_cap) // 8       # ~24 MiB on v7x (64 MiB), ~48 MiB on v5e/v6e (128 MiB)
    tile = max(1, min(BC, _MAX_TILE, (budget - const_bytes) // max(per_plane, 1)))
    if BC >= 2:
        tile = min(tile, (BC + 1) // 2)       # keep grid >= 2 so both v7x TensorCores get work
    grid = (pl.cdiv(BC, tile),)               # ragged last block; no divisor search

    needed = tile * per_plane + const_bytes
    vmem_limit = int(min((7 * vmem_cap) // 8,                  # never exceed physical VMEM
                         max(needed + (4 << 20), 32 << 20)))
    # TODO(synk): for planes too large for even tile=1 add an H-tiled grid axis with a
    # (K-1)-row halo (and a VPU fallback on v5e for very large H,W); for W < 128 pack
    # several planes along the lane axis to avoid lane-masked DMAs.

    out3 = pl.pallas_call(
        _blur2d_kernel,
        out_shape=jax.ShapeDtypeStruct((BC, H, W), x.dtype),
        grid_spec=pltpu.PrefetchScalarGridSpec(
            num_scalar_prefetch=0,
            grid=grid,
            in_specs=[
                pl.BlockSpec((H, H), lambda i: (0, 0)),          # A, resident in VMEM
                pl.BlockSpec((W, W), lambda i: (0, 0)),          # B, resident in VMEM
                pl.BlockSpec((tile, H, W), lambda i: (i, 0, 0)),
            ],
            out_specs=pl.BlockSpec((tile, H, W), lambda i: (i, 0, 0)),
        ),
        compiler_params=pltpu.CompilerParams(
            dimension_semantics=("parallel",),
            vmem_limit_bytes=vmem_limit,
        ),
    )(A, Bm, x3)
    return out3.reshape(B, C, H, W)


def _reference_blur2d(x, filt=FILTER):
    """Pure-JAX reference mirroring the PyTorch forward (direct 16-tap form)."""
    B, C, H, W = x.shape
    k = jnp.asarray(filt, jnp.float32)
    coeffs = jnp.outer(k, k)
    coeffs = coeffs / coeffs.sum()
    K = coeffs.shape[0]
    pad1, pad2 = _pads(K)
    xp = jnp.pad(x.astype(jnp.float32),
                 ((0, 0), (0, 0), (pad1, pad2), (pad1, pad2)))
    out = jnp.zeros((B, C, H, W), jnp.float32)
    for ki in range(K):
        for kj in range(K):
            out = out + coeffs[ki, kj] * xp[:, :, ki:ki + H, kj:kj + W]
    return out.astype(x.dtype)


if __name__ == "__main__":
    key = jax.random.PRNGKey(0)
    x = jax.random.normal(key, (2, 4, 16, 16), dtype=jnp.float32)

    out = jax.block_until_ready(blur2d(x))
    assert out.shape == (2, 4, 16, 16)
    ref = _reference_blur2d(x)
    np.testing.assert_allclose(np.asarray(out), np.asarray(ref), rtol=1e-4, atol=1e-4)

    # bf16 I/O path (MXU-native); tolerance covers bf16 intermediate rounding.
    xb = x.astype(jnp.bfloat16)
    outb = jax.block_until_ready(blur2d(xb))
    refb = _reference_blur2d(xb)
    np.testing.assert_allclose(np.asarray(outb.astype(jnp.float32)),
                               np.asarray(refb.astype(jnp.float32)),
                               rtol=5e-2, atol=5e-2)

    # Ragged B*C (grid does not divide evenly): exercises the cdiv grid / dropped tail.
    x2 = jax.random.normal(jax.random.PRNGKey(1), (1, 3, 16, 16), dtype=jnp.float32)
    out2 = jax.block_until_ready(blur2d(x2))
    np.testing.assert_allclose(np.asarray(out2), np.asarray(_reference_blur2d(x2)),
                               rtol=1e-4, atol=1e-4)

    print("KERNEL_OK")
</pallas_src>

<mosaic_0001>
module attributes {stable_mosaic.version = 11 : i64} {
  func.func @_blur2d_kernel(%arg0: i32, %arg1: memref<16x16xf32, #tpu.memory_space<vmem>>, %arg2: memref<16x16xf32, #tpu.memory_space<vmem>>, %arg3: memref<4x16x16xf32, #tpu.memory_space<vmem>>, %arg4: memref<4x16x16xf32, #tpu.memory_space<vmem>>) attributes {dimension_semantics = [#tpu.dimension_semantics<parallel>], iteration_bounds = array<i64: 2>, scalar_prefetch = 0 : i64, scratch_operands = 0 : i64, tpu.core_type = #tpu.core_type<tc>, window_params = [{pipeline_mode = #tpu.pipeline_mode<synchronous>, transform_indices = @transform_0, window_bounds = array<i64: 16, 16>}, {pipeline_mode = #tpu.pipeline_mode<synchronous>, transform_indices = @transform_1, window_bounds = array<i64: 16, 16>}, {transform_indices = @transform_2, window_bounds = array<i64: 4, 16, 16>}, {transform_indices = @transform_3, window_bounds = array<i64: 4, 16, 16>}]} {
    %c0 = arith.constant 0 : index
    %c0_0 = arith.constant 0 : index
    %c0_1 = arith.constant 0 : index
    %0 = vector.load %arg3[%c0, %c0_0, %c0_1] : memref<4x16x16xf32, #tpu.memory_space<vmem>>, vector<4x16x16xf32>
    %1 = vector.shape_cast %0 : vector<4x16x16xf32> to vector<64x16xf32>
    %c0_2 = arith.constant 0 : index
    %c0_3 = arith.constant 0 : index
    %2 = vector.load %arg2[%c0_2, %c0_3] : memref<16x16xf32, #tpu.memory_space<vmem>>, vector<16x16xf32>
    %cst = arith.constant dense<0.000000e+00> : vector<64x16xf32>
    %3 = tpu.matmul %1, %2, %cst {dimension_numbers = #tpu.dot_dimension_numbers<[1], [0], [0], [1], [0, 0, 1, 1], [], []>} : vector<64x16xf32>, vector<16x16xf32>, vector<64x16xf32> -> vector<64x16xf32>
    %4 = vector.shape_cast %3 : vector<64x16xf32> to vector<4x16x16xf32>
    %c0_4 = arith.constant 0 : index
    %c0_5 = arith.constant 0 : index
    %5 = vector.load %arg1[%c0_4, %c0_5] : memref<16x16xf32, #tpu.memory_space<vmem>>, vector<16x16xf32>
    %6 = vector.shape_cast %5 : vector<16x16xf32> to vector<1x16x16xf32>
    %7 = vector.broadcast %6 : vector<1x16x16xf32> to vector<4x16x16xf32>
    %cst_6 = arith.constant dense<0.000000e+00> : vector<4x16x16xf32>
    %8 = tpu.matmul %7, %4, %cst_6 {dimension_numbers = #tpu.dot_dimension_numbers<[2], [1], [1], [2], [0, 0, 0, 1, 1, 2], [0], [0]>} : vector<4x16x16xf32>, vector<4x16x16xf32>, vector<4x16x16xf32> -> vector<4x16x16xf32>
    %c0_7 = arith.constant 0 : index
    %c0_8 = arith.constant 0 : index
    %c0_9 = arith.constant 0 : index
    %9 = vector.load %arg4[%c0_7, %c0_8, %c0_9] : memref<4x16x16xf32, #tpu.memory_space<vmem>>, vector<4x16x16xf32>
    tpu.vector_store %arg4[%c0_7, %c0_8, %c0_9], %8 {strides = array<i32>} : memref<4x16x16xf32, #tpu.memory_space<vmem>>, vector<4x16x16xf32>,
    return
  }
  func.func @transform_0(%arg0: i32) -> (i32, i32) {
    %c0_i32 = arith.constant 0 : i32
    %c0_i32_0 = arith.constant 0 : i32
    %c0_i32_1 = arith.constant 0 : i32
    return %c0_i32, %c0_i32_0 : i32, i32
  }
  func.func @transform_1(%arg0: i32) -> (i32, i32) {
    %c0_i32 = arith.constant 0 : i32
    %c0_i32_0 = arith.constant 0 : i32
    %c0_i32_1 = arith.constant 0 : i32
    return %c0_i32, %c0_i32_0 : i32, i32
  }
  func.func @transform_2(%arg0: i32) -> (i32, i32, i32) {
    %c0_i32 = arith.constant 0 : i32
    %c0_i32_0 = arith.constant 0 : i32
    %c0_i32_1 = arith.constant 0 : i32
    return %arg0, %c0_i32, %c0_i32_0 : i32, i32, i32
  }
  func.func @transform_3(%arg0: i32) -> (i32, i32, i32) {
    %c0_i32 = arith.constant 0 : i32
    %c0_i32_0 = arith.constant 0 : i32
    %c0_i32_1 = arith.constant 0 : i32
    return %arg0, %c0_i32, %c0_i32_0 : i32, i32, i32
  }
}

</mosaic_0001>

<llo_original>
// kernel: tpu_custom_call.1
$region0: #{tpu_custom_call.1}
  #allocation0 [shape = 'u32[]', space=smem, size = 0x4, offset = 0x4, fixed_abs, tag = 'smem constant byte address 0x4 - core index']
  #allocation1 [shape = 'u32[72,128]{1,0:T(1,128)}', space=vmem, size = 0x9000, scoped, tag = 'internal scratch']
  %s0 = inlined_call_operand.hbm [shape: f32[16,16], index: 0, kind: input, shape index: {}]
  %s1 = inlined_call_operand.hbm [shape: f32[16,16], index: 1, kind: input, shape index: {}]
  %s2 = inlined_call_operand.hbm [shape: f32[8,16,16], index: 2, kind: input, shape index: {}]
  %s3 = inlined_call_operand.hbm [shape: f32[8,16,16], index: 3, kind: output, shape index: {}]
  %s4 = sld [smem:[#allocation0]]
  $region57: #{tpu_custom_call.1} parent=0
    _
  %s6 = ssub.s32 1, %s4
  %s7 = scalar_select 0, %s6, %s4
  $region1: #{tpu_custom_call.1} parent=0
    #allocation2 [shape = 'u8[8192]{0}', space=vmem, size = 0x2000, scoped, tag = 'input window, operand 0, single buffered']
    #allocation3 [shape = 's32[2]{0}', space=sflag, size = 0x8, scoped, tag = 'scoped memory for tpu_custom_call.1']
    #allocation4 [shape = 's32[2]{0}', space=sflag, size = 0x8, scoped, tag = 'scoped memory for tpu_custom_call.1']
    #allocation5 [shape = 'u8[8192]{0}', space=vmem, size = 0x2000, scoped, tag = 'input window, operand 1, single buffered']
    #allocation6 [shape = 's32[1]{0}', space=sflag, size = 0x4, scoped, tag = 'scoped memory for tpu_custom_call.1']
    #allocation7 [shape = 'u8[65536]{0}', space=vmem, size = 0x10000, scoped, tag = 'input window, operand 2']
    #allocation8 [shape = 'u8[65536]{0}', space=vmem, size = 0x10000, scoped, tag = 'output window, operand 0']
    %8 = vsyncpa [#allocation3], 0
    %9 = vsyncpa [#allocation6], 0
    %10 = vsyncpa [#allocation4], 0
    %s11 = scalar_lea.sflag [#allocation4], 1
    %12 = vsyncpa %s11, 0
    loop: start=0, step=1, limit=4
    $region2: #{tpu_custom_call.1} parent=1 // loop_pre_header
      _
    $region3: #{tpu_custom_call.1} parent=1 // loop_header
      %s14 = sphi 0, %s18
      %p15 = scmp.ge.s32.totalorder %s14, 4
      %s22 = sphi 0, %s22
      %s24 = sphi 0, %s22
      %s25 = sphi 0, %s24
      %s39 = sphi 0, %s25
      %s43 = sphi 0, %s43
      %s45 = sphi 0, %s43
      %s46 = sphi 0, %s45
      %s60 = sphi 0, %s46
      %s66 = sphi 0, %s68
      %s69 = sphi 0, %s66
      %s70 = sphi 0, %s69
      %s86 = sphi 0, %s70
      %s92 = sphi 0, %s94
      %s95 = sphi 0, %s92
      %s96 = sphi 0, %s95
      %s112 = sphi 0, %s96
    $region4: #{tpu_custom_call.1} parent=1 // loop_header_branch
      %17 = sbr.rel (%p15) target = $region8
    $region5: #{tpu_custom_call.1} parent=1 // loop_body
      %s19 = ssub.s32 %s14, 1
      %s20 = ssub.s32 %s14, 2
      %s21 = sadd.s32 %s14, 1
      %s23 = sadd.s32 %s22, 1
      %p26 = scmp.eq.s32.totalorder %s14, 1
      %p27 = scmp.ne.s32.totalorder %s22, %s24
      %p28 = scmp.eq.s32.totalorder %s14, 0
      %p29 = por %p27, %p28
      %p30 = scmp.ne.s32.totalorder %s22, %s24
      %p31 = scmp.eq.s32.totalorder %s19, 1
      %p32 = por %p30, %p31
      %p33 = scmp.ne.s32.totalorder %s24, %s25
      %p34 = scmp.eq.s32.totalorder %s19, 0
      %p35 = por %p33, %p34
      %p36 = scmp.ne.s32.totalorder %s24, %s25
      %p37 = scmp.eq.s32.totalorder %s20, 1
      %p38 = por %p36, %p37
      %p40 = scmp.ne.s32.totalorder %s25, %s39
      %p41 = scmp.eq.s32.totalorder %s20, 0
      %p42 = por %p40, %p41
      %s44 = sadd.s32 %s43, 1
      %p47 = scmp.eq.s32.totalorder %s14, 1
      %p48 = scmp.ne.s32.totalorder %s43, %s45
      %p49 = scmp.eq.s32.totalorder %s14, 0
      %p50 = por %p48, %p49
      %p51 = scmp.ne.s32.totalorder %s43, %s45
      %p52 = scmp.eq.s32.totalorder %s19, 1
      %p53 = por %p51, %p52
      %p54 = scmp.ne.s32.totalorder %s45, %s46
      %p55 = scmp.eq.s32.totalorder %s19, 0
      %p56 = por %p54, %p55
      %p57 = scmp.ne.s32.totalorder %s45, %s46
      %p58 = scmp.eq.s32.totalorder %s20, 1
      %p59 = por %p57, %p58
      %p61 = scmp.ne.s32.totalorder %s46, %s60
      %p62 = scmp.eq.s32.totalorder %s20, 0
      %p63 = por %p61, %p62
      %s64 = ssub.s32 %s14, %s21
      %p65 = scmp.eq.s32.totalorder %s64, 0
      %s67 = sadd.s32 %s66, 1
      %s68 = scalar_select %p65, %s66, %s67
      %p71 = pneg %p65
      %p72 = scmp.eq.s32.totalorder %s14, 1
      %p73 = por %p71, %p72
      %p74 = scmp.ne.s32.totalorder %s66, %s69
      %p75 = scmp.eq.s32.totalorder %s14, 0
      %p76 = por %p74, %p75
      %p77 = scmp.ne.s32.totalorder %s66, %s69
      %p78 = scmp.eq.s32.totalorder %s19, 1
      %p79 = por %p77, %p78
      %p80 = scmp.ne.s32.totalorder %s69, %s70
      %p81 = scmp.eq.s32.totalorder %s19, 0
      %p82 = por %p80, %p81
      %p83 = scmp.ne.s32.totalorder %s69, %s70
      %p84 = scmp.eq.s32.totalorder %s20, 1
      %p85 = por %p83, %p84
      %p87 = scmp.ne.s32.totalorder %s70, %s86
      %p88 = scmp.eq.s32.totalorder %s20, 0
      %p89 = por %p87, %p88
      %s90 = ssub.s32 %s14, %s21
      %p91 = scmp.eq.s32.totalorder %s90, 0
      %s93 = sadd.s32 %s92, 1
      %s94 = scalar_select %p91, %s92, %s93
      %p97 = pneg %p91
      %p98 = scmp.eq.s32.totalorder %s14, 1
      %p99 = por %p97, %p98
      %p100 = scmp.ne.s32.totalorder %s92, %s95
      %p101 = scmp.eq.s32.totalorder %s14, 0
      %p102 = por %p100, %p101
      %p103 = scmp.ne.s32.totalorder %s92, %s95
      %p104 = scmp.eq.s32.totalorder %s19, 1
      %p105 = por %p103, %p104
      %p106 = scmp.ne.s32.totalorder %s95, %s96
      %p107 = scmp.eq.s32.totalorder %s19, 0
      %p108 = por %p106, %p107
      %p109 = scmp.ne.s32.totalorder %s95, %s96
      %p110 = scmp.eq.s32.totalorder %s20, 1
      %p111 = por %p109, %p110
      %p113 = scmp.ne.s32.totalorder %s96, %s112
      %p114 = scmp.eq.s32.totalorder %s20, 0
      %p115 = por %p113, %p114
      %p116 = scmp.le.s32.totalorder 1, %s14
      %p117 = scmp.lt.s32.totalorder %s14, 3
      %p118 = pnand %p116, %p117
      %p119 = pneg %p118
      // Predicated region
      $region9: #{tpu_custom_call.1} parent=5 // pred_check
        _
      $region10: #{tpu_custom_call.1} parent=5 // pred_check_branch
        %121 = sbr.rel (%p118) target = $region12
      $region11: #{tpu_custom_call.1} parent=5 // pred_region
        %s122 = ssub.s32 %s14, 1
        // Predicated region
        $region13: #{tpu_custom_call.1} parent=11 // pred_check
          %p123 = pneg %p35
        $region14: #{tpu_custom_call.1} parent=11 // pred_check_branch
          %125 = sbr.rel (%p123) target = $region16
        $region15: #{tpu_custom_call.1} parent=11 // pred_region
          %127 = vsyncadd [#allocation3], 0
          %s128 = sshll.u32 %s0, 4
          %s129 = int_to_ptr.hbm [resolvable:$true] %s128
          %s130 = sshll.u32 [#allocation2], 4
          %s131 = int_to_ptr.vmem [resolvable:$true] %s130
          %136 = dma.hbm_to_vmem [thread:$0]  %s129, 256, %s131, [#allocation3], 128, 128, 8
        $region16: #{tpu_custom_call.1} parent=11 // pred_fallthru
          _
        // Predicated region
        $region17: #{tpu_custom_call.1} parent=11 // pred_check
          %p137 = pneg %p56
        $region18: #{tpu_custom_call.1} parent=11 // pred_check_branch
          %139 = sbr.rel (%p137) target = $region20
        $region19: #{tpu_custom_call.1} parent=11 // pred_region
          %141 = vsyncadd [#allocation6], 0
          %s142 = sshll.u32 %s1, 4
          %s143 = int_to_ptr.hbm [resolvable:$true] %s142
          %s144 = sshll.u32 [#allocation5], 4
          %s145 = int_to_ptr.vmem [resolvable:$true] %s144
          %150 = dma.hbm_to_vmem [thread:$0]  %s143, 256, %s145, [#allocation6], 128, 128, 8
        $region20: #{tpu_custom_call.1} parent=11 // pred_fallthru
          _
      $region12: #{tpu_custom_call.1} parent=5 // pred_fallthru
        _
      %p151 = scmp.lt.s32.totalorder %s14, 2
      // Predicated region
      $region21: #{tpu_custom_call.1} parent=5 // pred_check
        %p152 = pneg %p151
      $region22: #{tpu_custom_call.1} parent=5 // pred_check_branch
        %154 = sbr.rel (%p152) target = $region24
      $region23: #{tpu_custom_call.1} parent=5 // pred_region
        // Predicated region
        $region25: #{tpu_custom_call.1} parent=23 // pred_check
          %p155 = pneg %p76
        $region26: #{tpu_custom_call.1} parent=23 // pred_check_branch
          %157 = sbr.rel (%p155) target = $region28
        $region27: #{tpu_custom_call.1} parent=23 // pred_region
          %s158 = sand.u32 %s14, 1
          %s159 = scalar_lea.sflag [#allocation3], %s158
          %s160 = sand.u32 %s66, 1
          %s161 = smul.addr %s160, 64
          %s162 = scalar_lea.vmem [#allocation7], %s161
          %s163 = smul.u32 4, %s14
          %165 = vsyncadd %s159, 0
          %s166 = smul.addr %s163, 2
          %s167 = smul.addr %s166, 8
          %s168 = scalar_lea.hbm %s2, %s167
          %s169 = sshll.u32 %s168, 4
          %s170 = int_to_ptr.hbm [resolvable:$true] %s169
          %s171 = sshll.u32 %s162, 4
          %s172 = int_to_ptr.vmem [resolvable:$true] %s171
          %177 = dma.hbm_to_vmem [thread:$0]  %s170, 1024, %s172, %s159, 128, 128, 8
        $region28: #{tpu_custom_call.1} parent=23 // pred_fallthru
          _
      $region24: #{tpu_custom_call.1} parent=5 // pred_fallthru
        _
      %p178 = scmp.le.s32.totalorder 1, %s14
      %p179 = scmp.lt.s32.totalorder %s14, 3
      %p180 = pnand %p178, %p179
      %p181 = pneg %p180
      // Predicated region
      $region29: #{tpu_custom_call.1} parent=5 // pred_check
        _
      $region30: #{tpu_custom_call.1} parent=5 // pred_check_branch
        %183 = sbr.rel (%p180) target = $region32
      $region31: #{tpu_custom_call.1} parent=5 // pred_region
        %s184 = ssub.s32 %s14, 1
        // Predicated region
        $region33: #{tpu_custom_call.1} parent=31 // pred_check
          %p185 = pneg %p35
        $region34: #{tpu_custom_call.1} parent=31 // pred_check_branch
          %187 = sbr.rel (%p185) target = $region36
        $region35: #{tpu_custom_call.1} parent=31 // pred_region
          %189 = dma.done [#allocation3], 256
        $region36: #{tpu_custom_call.1} parent=31 // pred_fallthru
          _
        // Predicated region
        $region37: #{tpu_custom_call.1} parent=31 // pred_check
          %p190 = pneg %p56
        $region38: #{tpu_custom_call.1} parent=31 // pred_check_branch
          %192 = sbr.rel (%p190) target = $region40
        $region39: #{tpu_custom_call.1} parent=31 // pred_region
          %194 = dma.done [#allocation6], 256
        $region40: #{tpu_custom_call.1} parent=31 // pred_fallthru
          _
        %s195 = sand.u32 %s19, 1
        %s196 = scalar_lea.sflag [#allocation3], %s195
        %s197 = sand.u32 %s69, 1
        %s198 = smul.addr %s197, 64
        %s199 = scalar_lea.vmem [#allocation7], %s198
        // Predicated region
        $region41: #{tpu_custom_call.1} parent=31 // pred_check
          %p200 = pneg %p82
        $region42: #{tpu_custom_call.1} parent=31 // pred_check_branch
          %202 = sbr.rel (%p200) target = $region44
        $region43: #{tpu_custom_call.1} parent=31 // pred_region
          %204 = dma.done %s196, 1024
        $region44: #{tpu_custom_call.1} parent=31 // pred_fallthru
          _
        %p205 = pneg %p35
        %p206 = pneg %p32
        %p207 = pneg %p56
        %p208 = pneg %p53
        %s209 = sand.u32 %s19, 1
        %s210 = scalar_lea.sflag [#allocation3], %s209
        %s211 = sand.u32 %s69, 1
        %s212 = smul.addr %s211, 64
        %s213 = scalar_lea.vmem [#allocation7], %s212
        %p214 = pneg %p82
        %p215 = pneg %p79
        %p216 = pneg %p108
        %p217 = pneg %p105
        %s218 = sand.u32 %s95, 1
        %s219 = scalar_lea.sflag [#allocation4], %s218
        %s220 = sand.u32 %s95, 1
        %s221 = smul.addr %s220, 64
        %s222 = scalar_lea.vmem [#allocation8], %s221
        %s223 = smul.u32 4, %s19
        %s224 = smul.u32 4, %s19
        %v225 = vld [vmem:[%s199] sm:$0xff]
        %v226 = vld [vmem:[%s199 + $0x8] sm:$0xff]
        %v227 = vld [vmem:[%s199 + $0x10] sm:$0xff]
        %v228 = vld [vmem:[%s199 + $0x18] sm:$0xff]
        %v229 = vld [vmem:[%s199 + $0x20] sm:$0xff]
        %v230 = vld [vmem:[%s199 + $0x28] sm:$0xff]
        %v231 = vld [vmem:[%s199 + $0x30] sm:$0xff]
        %v232 = vld [vmem:[%s199 + $0x38] sm:$0xff]
        %v233 = vld [vmem:[#allocation5] sm:$0xff]
        %v234 = vld [vmem:[#allocation5 + $0x8] sm:$0xff]
        %vm235 = vcmask 130048
        %v237 = vsel %vm235, %v225, 0
        %v240 = vsel %vm235, %v226, 0
        %v243 = vsel %vm235, %v227, 0
        %v246 = vsel %vm235, %v228, 0
        %v249 = vsel %vm235, %v229, 0
        %v252 = vsel %vm235, %v230, 0
        %v255 = vsel %vm235, %v231, 0
        %v258 = vsel %vm235, %v232, 0
        %260 = vmatpush.msra.mxu0 0.0
        %261 = vmatpush.msra.mxu0 0.0
        %262 = vmatpush.msra.mxu0 0.0
        %263 = vmatpush.msra.mxu0 0.0
        %264 = vmatpush.msra.mxu0 0.0
        %265 = vmatpush.msra.mxu0 0.0
        %266 = vmatpush.msra.mxu0 0.0
        %267 = vmatpush.msra.mxu0 0.0
        %268 = vmatpush.msra.mxu0 0.0
        %269 = vmatpush.msra.mxu0 0.0
        %270 = vmatpush.msra.mxu0 0.0
        %271 = vmatpush.msra.mxu0 0.0
        %272 = vmatpush.msra.mxu0 0.0
        %273 = vmatpush.msra.mxu0 0.0
        %274 = vmatpush.msra.mxu0 %v234
        %275 = vmatpush.msra.mxu0 %v233
        %276 = vmatmul.f32.gmra.mxu0 %v237
        %v277 = vpop.f32.mrf.mxu0
        %v278 = vadd.f32 0.0, %v277
        %279 = vmatmul.f32.gmra.mxu0 %v240
        %v280 = vpop.f32.mrf.mxu0
        %v281 = vadd.f32 0.0, %v280
        %282 = vmatmul.f32.gmra.mxu0 %v243
        %v283 = vpop.f32.mrf.mxu0
        %v284 = vadd.f32 0.0, %v283
        %285 = vmatmul.f32.gmra.mxu0 %v246
        %v286 = vpop.f32.mrf.mxu0
        %v287 = vadd.f32 0.0, %v286
        %288 = vmatmul.f32.gmra.mxu0 %v249
        %v289 = vpop.f32.mrf.mxu0
        %v290 = vadd.f32 0.0, %v289
        %291 = vmatmul.f32.gmra.mxu0 %v252
        %v292 = vpop.f32.mrf.mxu0
        %v293 = vadd.f32 0.0, %v292
        %294 = vmatmul.f32.gmra.mxu0 %v255
        %v295 = vpop.f32.mrf.mxu0
        %v296 = vadd.f32 0.0, %v295
        %297 = vmatmul.f32.gmra.mxu0 %v258
        %v298 = vpop.f32.mrf.mxu0
        %v299 = vadd.f32 0.0, %v298
        %300 = vdwg.mxu0
        %v301 = vld [vmem:[#allocation2] sm:$0xff]
        %v302 = vld [vmem:[#allocation2 + $0x8] sm:$0xff]
        %v304 = vsel %vm235, %v301, 0
        %v307 = vsel %vm235, %v302, 0
        %309 = vmatpush.msra.mxu0 0.0
        %310 = vmatpush.msra.mxu0 0.0
        %311 = vmatpush.msra.mxu0 0.0
        %312 = vmatpush.msra.mxu0 0.0
        %313 = vmatpush.msra.mxu0 0.0
        %314 = vmatpush.msra.mxu0 0.0
        %315 = vmatpush.msra.mxu0 0.0
        %316 = vmatpush.msra.mxu0 0.0
        %317 = vmatpush.msra.mxu0 0.0
        %318 = vmatpush.msra.mxu0 0.0
        %319 = vmatpush.msra.mxu0 0.0
        %320 = vmatpush.msra.mxu0 0.0
        %321 = vmatpush.msra.mxu0 0.0
        %322 = vmatpush.msra.mxu0 0.0
        %323 = vmatpush.msra.mxu0 %v281
        %324 = vmatpush.msra.mxu0 %v278
        %325 = vmatmul.f32.gmra.mxu0 %v304
        %v326 = vpop.f32.mrf.mxu0
        %v327 = vadd.f32 0.0, %v326
        %328 = vmatmul.f32.gmra.mxu0 %v307
        %v329 = vpop.f32.mrf.mxu0
        %v330 = vadd.f32 0.0, %v329
        %331 = vdwg.mxu0
        %332 = vmatpush.msra.mxu0 0.0
        %333 = vmatpush.msra.mxu0 0.0
        %334 = vmatpush.msra.mxu0 0.0
        %335 = vmatpush.msra.mxu0 0.0
        %336 = vmatpush.msra.mxu0 0.0
        %337 = vmatpush.msra.mxu0 0.0
        %338 = vmatpush.msra.mxu0 0.0
        %339 = vmatpush.msra.mxu0 0.0
        %340 = vmatpush.msra.mxu0 0.0
        %341 = vmatpush.msra.mxu0 0.0
        %342 = vmatpush.msra.mxu0 0.0
        %343 = vmatpush.msra.mxu0 0.0
        %344 = vmatpush.msra.mxu0 0.0
        %345 = vmatpush.msra.mxu0 0.0
        %346 = vmatpush.msra.mxu0 %v287
        %347 = vmatpush.msra.mxu0 %v284
        %348 = vmatmul.f32.gmra.mxu0 %v304
        %v349 = vpop.f32.mrf.mxu0
        %v350 = vadd.f32 0.0, %v349
        %351 = vmatmul.f32.gmra.mxu0 %v307
        %v352 = vpop.f32.mrf.mxu0
        %v353 = vadd.f32 0.0, %v352
        %354 = vdwg.mxu0
        %355 = vmatpush.msra.mxu0 0.0
        %356 = vmatpush.msra.mxu0 0.0
        %357 = vmatpush.msra.mxu0 0.0
        %358 = vmatpush.msra.mxu0 0.0
        %359 = vmatpush.msra.mxu0 0.0
        %360 = vmatpush.msra.mxu0 0.0
        %361 = vmatpush.msra.mxu0 0.0
        %362 = vmatpush.msra.mxu0 0.0
        %363 = vmatpush.msra.mxu0 0.0
        %364 = vmatpush.msra.mxu0 0.0
        %365 = vmatpush.msra.mxu0 0.0
        %366 = vmatpush.msra.mxu0 0.0
        %367 = vmatpush.msra.mxu0 0.0
        %368 = vmatpush.msra.mxu0 0.0
        %369 = vmatpush.msra.mxu0 %v293
        %370 = vmatpush.msra.mxu0 %v290
        %371 = vmatmul.f32.gmra.mxu0 %v304
        %v372 = vpop.f32.mrf.mxu0
        %v373 = vadd.f32 0.0, %v372
        %374 = vmatmul.f32.gmra.mxu0 %v307
        %v375 = vpop.f32.mrf.mxu0
        %v376 = vadd.f32 0.0, %v375
        %377 = vdwg.mxu0
        %378 = vmatpush.msra.mxu0 0.0
        %379 = vmatpush.msra.mxu0 0.0
        %380 = vmatpush.msra.mxu0 0.0
        %381 = vmatpush.msra.mxu0 0.0
        %382 = vmatpush.msra.mxu0 0.0
        %383 = vmatpush.msra.mxu0 0.0
        %384 = vmatpush.msra.mxu0 0.0
        %385 = vmatpush.msra.mxu0 0.0
        %386 = vmatpush.msra.mxu0 0.0
        %387 = vmatpush.msra.mxu0 0.0
        %388 = vmatpush.msra.mxu0 0.0
        %389 = vmatpush.msra.mxu0 0.0
        %390 = vmatpush.msra.mxu0 0.0
        %391 = vmatpush.msra.mxu0 0.0
        %392 = vmatpush.msra.mxu0 %v299
        %393 = vmatpush.msra.mxu0 %v296
        %394 = vmatmul.f32.gmra.mxu0 %v304
        %v395 = vpop.f32.mrf.mxu0
        %v396 = vadd.f32 0.0, %v395
        %397 = vmatmul.f32.gmra.mxu0 %v307
        %v398 = vpop.f32.mrf.mxu0
        %v399 = vadd.f32 0.0, %v398
        %400 = vdwg.mxu0
        %401 = vst.msk [vmem:[%s222] sm:$0xff] %vm235, %v327
        %402 = vst.msk [vmem:[%s222 + $0x8] sm:$0xff] %vm235, %v330
        %403 = vst.msk [vmem:[%s222 + $0x10] sm:$0xff] %vm235, %v350
        %404 = vst.msk [vmem:[%s222 + $0x18] sm:$0xff] %vm235, %v353
        %405 = vst.msk [vmem:[%s222 + $0x20] sm:$0xff] %vm235, %v373
        %406 = vst.msk [vmem:[%s222 + $0x28] sm:$0xff] %vm235, %v376
        %407 = vst.msk [vmem:[%s222 + $0x30] sm:$0xff] %vm235, %v396
        %408 = vst.msk [vmem:[%s222 + $0x38] sm:$0xff] %vm235, %v399
        %s409 = sand.u32 %s95, 1
        %s410 = scalar_lea.sflag [#allocation4], %s409
        %s411 = sand.u32 %s95, 1
        %s412 = smul.addr %s411, 64
        %s413 = scalar_lea.vmem [#allocation8], %s412
        // Predicated region
        $region45: #{tpu_custom_call.1} parent=31 // pred_check
          %p414 = pneg %p105
        $region46: #{tpu_custom_call.1} parent=31 // pred_check_branch
          %416 = sbr.rel (%p414) target = $region48
        $region47: #{tpu_custom_call.1} parent=31 // pred_region
          %s417 = smul.u32 4, %s19
          %419 = vsyncadd %s410, 0
          %s420 = smul.addr %s417, 2
          %s421 = smul.addr %s420, 8
          %s422 = scalar_lea.hbm %s3, %s421
          %s423 = sshll.u32 %s413, 4
          %s424 = int_to_ptr.vmem [resolvable:$true] %s423
          %s425 = sshll.u32 %s422, 4
          %s426 = int_to_ptr.hbm [resolvable:$true] %s425
          %431 = dma.vmem_to_hbm [thread:$0]  %s424, 1024, %s426, %s410, 128, 128, 8
        $region48: #{tpu_custom_call.1} parent=31 // pred_fallthru
          _
      $region32: #{tpu_custom_call.1} parent=5 // pred_fallthru
        _
      %p432 = scmp.le.s32.totalorder 2, %s14
      // Predicated region
      $region49: #{tpu_custom_call.1} parent=5 // pred_check
        %p433 = pneg %p432
      $region50: #{tpu_custom_call.1} parent=5 // pred_check_branch
        %435 = sbr.rel (%p433) target = $region52
      $region51: #{tpu_custom_call.1} parent=5 // pred_region
        %s436 = ssub.s32 %s14, 2
        // Predicated region
        $region53: #{tpu_custom_call.1} parent=51 // pred_check
          %p437 = pneg %p111
        $region54: #{tpu_custom_call.1} parent=51 // pred_check_branch
          %439 = sbr.rel (%p437) target = $region56
        $region55: #{tpu_custom_call.1} parent=51 // pred_region
          %s440 = sand.u32 %s96, 1
          %s441 = scalar_lea.sflag [#allocation4], %s440
          %s442 = sand.u32 %s96, 1
          %s443 = smul.addr %s442, 64
          %s444 = scalar_lea.vmem [#allocation8], %s443
          %446 = dma.done %s441, 1024
        $region56: #{tpu_custom_call.1} parent=51 // pred_fallthru
          _
      $region52: #{tpu_custom_call.1} parent=5 // pred_fallthru
        _
    $region6: #{tpu_custom_call.1} parent=1 // loop_footer
      %s18 = sadd.s32 1, %s14
    $region7: #{tpu_custom_call.1} parent=1 // loop_footer_branch
      %13 = sbr.rel target = $region3
    $region8: #{tpu_custom_call.1} parent=1 // loop_exit
      _
    %447 = vsyncpa [#allocation3], 1
    %s448 = scalar_lea.sflag [#allocation3], 1
    %449 = vsyncpa %s448, 1
    %450 = vsyncpa [#allocation6], 1
    %451 = vsyncpa [#allocation4], 1
    %s452 = scalar_lea.sflag [#allocation4], 1
    %453 = vsyncpa %s452, 1

</llo_original>
